<compile_context>
chip_gen: v6e
topology: v6e:2x2x1
jax: 0.10.0
libtpu: 0.0.40
codegen_flags: <defaults>
</compile_context>

<pallas_src>
import functools
import math

import jax
import jax.numpy as jnp
from jax import lax
from jax.experimental import pallas as pl
from jax.experimental.pallas import tpu as pltpu


def _round_up(v, m):
    return -(-v // m) * m


@functools.lru_cache(maxsize=1)
def _budgets():
    """(x-tile byte target, scoped VMEM limit), derived from the chip's VMEM."""
    try:
        vmem_phys = int(pltpu.get_tpu_info().vmem_capacity_bytes)
    except Exception:
        vmem_phys = 64 * 1024 * 1024          # conservative (v7x per-core) default
    # 2-4 MiB streaming tiles already sit on the ~85% HBM-roofline plateau;
    # 2x(in+out) double buffers + whole-tile f32 temporaries must stay well
    # under physical VMEM (64 MiB on v7x, 128 MiB on v5e/v6e).
    tile_bytes = int(min(4 * 1024 * 1024, max(1 * 1024 * 1024, vmem_phys // 16)))
    vmem_limit = int(min(vmem_phys // 2, 64 * 1024 * 1024))
    return tile_bytes, vmem_limit


def _pick_row_tile(rows, c_lane_padded, itemsize, tile_bytes, min_steps=4):
    """Row tile for (rows, C)-style slabs (reduce over lanes).

    Sized from the PADDED VMEM footprint (lane dim already rounded to 128 by
    the caller) including the f32 upcast temporaries, and guaranteeing at
    least `min_steps` grid steps so HBM DMA pipelines / megacore shards.
    """
    rows = max(int(rows), 1)
    bytes_per_row = c_lane_padded * max(itemsize, 4)      # f32 temps dominate
    tr_cap = max(8, (tile_bytes // max(1, bytes_per_row)) // 8 * 8)
    tr_steps = max(8, _round_up(-(-rows // min_steps), 8))
    tr = min(tr_cap, tr_steps)
    if tr >= rows:
        tr = rows                                          # full extent: always legal
    return tr


def _pick_lane_tile(hw, n, c, itemsize, tile_bytes, min_steps=4):
    """Spatial (lane) tile for the channels-on-sublanes kernel."""
    hw = max(int(hw), 1)
    sublane = max(1, 32 // itemsize)                       # 8 f32 / 16 bf16 / 32 int8
    per_col = max(_round_up(c, sublane) * itemsize, _round_up(c, 8) * 4)
    t_cap = max(128, (tile_bytes // max(1, per_col)) // 128 * 128)
    want_spatial = -(-min_steps // max(1, int(n)))         # steps needed along hw
    t_steps = max(128, _round_up(-(-hw // want_spatial), 128))
    t = min(t_cap, t_steps)
    if t >= hw:
        t = hw                                             # full extent: always legal
    return t


# -----------------------------------------------------------------------------
# Kernels.  All accumulate in f32 with the biased variance + eps formula of the
# PyTorch module (centered two-pass variance for numerical safety; the kernel
# is DMA-bound, so the safer form costs nothing measurable).  The normalize
# pass re-reads x from the input VMEM tile instead of keeping the centered
# tile live across the variance reduction (saves one whole-tile f32 temp).
# -----------------------------------------------------------------------------
def _ln_last_axis_kernel(x_ref, w_ref, b_ref, o_ref, *, eps):
    # x_ref: (TR, C) tile, C on lanes.  w_ref / b_ref: (1, C) f32.
    x = x_ref[...].astype(jnp.float32)
    mean = jnp.mean(x, axis=-1, keepdims=True)
    var = jnp.mean(jnp.square(x - mean), axis=-1, keepdims=True)
    inv = lax.rsqrt(var + eps)                             # EUP slot
    xn = (x_ref[...].astype(jnp.float32) - mean) * inv
    o_ref[...] = (xn * w_ref[...] + b_ref[...]).astype(o_ref.dtype)


def _ln_grouped_lane_kernel(x_ref, w_ref, b_ref, o_ref, *, eps, c):
    # Lane-dense small-C path: x_ref is (TR, 128); each kernel row packs
    # 128 // c original rows as aligned length-c lane segments (pure view of
    # the contiguous (rows, C) slab).  w_ref / b_ref: weight/bias tiled
    # 128 // c times -> (1, 128) f32.
    x = x_ref[...].astype(jnp.float32)
    lanes = x.shape[-1]                                    # 128 (static)
    lane_id = lax.broadcasted_iota(jnp.int32, x.shape, 1)

    def seg_allsum(v):
        # Butterfly all-reduce within each aligned length-c lane segment
        # (c is a power of two): partner of lane i at step k is i ^ k, built
        # from two XLU rolls + one VPU select -- hidden under the HBM DMA.
        k = 1
        while k < c:
            fwd = pltpu.roll(v, lanes - k, axis=1)         # v[i + k]
            bwd = pltpu.roll(v, k, axis=1)                 # v[i - k]
            v = v + jnp.where((lane_id & k) == 0, fwd, bwd)
            k *= 2
        return v

    inv_c = jnp.float32(1.0 / c)
    mean = seg_allsum(x) * inv_c
    var = seg_allsum(jnp.square(x - mean)) * inv_c
    inv = lax.rsqrt(var + eps)
    xn = (x_ref[...].astype(jnp.float32) - mean) * inv
    o_ref[...] = (xn * w_ref[...] + b_ref[...]).astype(o_ref.dtype)


def _ln_sublane_axis_kernel(x_ref, w_ref, b_ref, o_ref, *, eps):
    # x_ref: (1, C, T) tile, C on sublanes, spatial lane-dense.
    # w_ref / b_ref: (1, C, 1) f32.
    x = x_ref[...].astype(jnp.float32)
    mean = jnp.mean(x, axis=1, keepdims=True)
    var = jnp.mean(jnp.square(x - mean), axis=1, keepdims=True)
    inv = lax.rsqrt(var + eps)
    xn = (x_ref[...].astype(jnp.float32) - mean) * inv
    o_ref[...] = (xn * w_ref[...] + b_ref[...]).astype(o_ref.dtype)


# -----------------------------------------------------------------------------
# Wrappers.
# -----------------------------------------------------------------------------
def _layernorm_channels_last(x, weight, bias, eps):
    C = x.shape[-1]
    rows = int(math.prod(x.shape[:-1])) if x.ndim > 1 else 1
    itemsize = jnp.dtype(x.dtype).itemsize
    tile_bytes, vmem_limit = _budgets()
    w32 = weight.astype(jnp.float32)
    b32 = bias.astype(jnp.float32)

    use_grouped = (
        0 < C < 128
        and (C & (C - 1)) == 0                  # power of two -> divides 128
        and rows % (128 // C) == 0
    )
    if use_grouped:
        G = 128 // C
        rows_g = rows // G
        x2d = x.reshape(rows_g, G * C)          # contiguous view, lane-dense
        TR = _pick_row_tile(rows_g, 128, itemsize, tile_bytes)
        out = pl.pallas_call(
            functools.partial(_ln_grouped_lane_kernel, eps=eps, c=C),
            out_shape=jax.ShapeDtypeStruct((rows_g, G * C), x.dtype),
            grid_spec=pltpu.PrefetchScalarGridSpec(
                num_scalar_prefetch=0,
                grid=(pl.cdiv(rows_g, TR),),
                in_specs=[
                    pl.BlockSpec((TR, G * C), lambda i: (i, 0)),
                    pl.BlockSpec((1, G * C), lambda i: (0, 0)),
                    pl.BlockSpec((1, G * C), lambda i: (0, 0)),
                ],
                out_specs=pl.BlockSpec((TR, G * C), lambda i: (i, 0)),
            ),
            compiler_params=pltpu.CompilerParams(
                dimension_semantics=("parallel",),
                vmem_limit_bytes=vmem_limit,
            ),
        )(x2d,
          jnp.tile(w32, G).reshape(1, G * C),
          jnp.tile(b32, G).reshape(1, G * C))
        return out.reshape(x.shape)

    # General path: C on lanes.  Fully lane-dense when C is a multiple of 128;
    # ConvNeXt's C in {96, 192, 384, 768} runs at >= 75% lane utilization.
    # TODO(synk): non-power-of-two C < 128 stays lane-sparse here; an
    # lcm(C,128)-wide lane grouping with a masked segmented reduce would fix it.
    x2d = x.reshape(rows, C)
    TR = _pick_row_tile(rows, _round_up(C, 128), itemsize, tile_bytes)
    out = pl.pallas_call(
        functools.partial(_ln_last_axis_kernel, eps=eps),
        out_shape=jax.ShapeDtypeStruct((rows, C), x.dtype),
        grid_spec=pltpu.PrefetchScalarGridSpec(
            num_scalar_prefetch=0,
            grid=(pl.cdiv(rows, TR),),
            in_specs=[
                pl.BlockSpec((TR, C), lambda i: (i, 0)),
                pl.BlockSpec((1, C), lambda i: (0, 0)),
                pl.BlockSpec((1, C), lambda i: (0, 0)),
            ],
            out_specs=pl.BlockSpec((TR, C), lambda i: (i, 0)),
        ),
        compiler_params=pltpu.CompilerParams(
            dimension_semantics=("parallel",),
            vmem_limit_bytes=vmem_limit,
        ),
    )(x2d, w32.reshape(1, C), b32.reshape(1, C))
    return out.reshape(x.shape)


def _layernorm_channels_first(x, weight, bias, eps):
    # NCHW (or NCL / NCDHW): reduce over axis 1 directly -- no transpose passes.
    N, C = x.shape[0], x.shape[1]
    hw = int(math.prod(x.shape[2:])) if x.ndim > 2 else 1
    itemsize = jnp.dtype(x.dtype).itemsize
    tile_bytes, vmem_limit = _budgets()
    x3 = x.reshape(N, C, hw)                    # contiguous view, no copy
    T = _pick_lane_tile(hw, N, C, itemsize, tile_bytes)
    # TODO(synk): for C < 8 (f32) the (1, C, T) tile under-fills the sublane
    # axis; padded-C accounting above keeps T inside the VMEM budget anyway.
    out = pl.pallas_call(
        functools.partial(_ln_sublane_axis_kernel, eps=eps),
        out_shape=jax.ShapeDtypeStruct((N, C, hw), x.dtype),
        grid_spec=pltpu.PrefetchScalarGridSpec(
            num_scalar_prefetch=0,
            grid=(N, pl.cdiv(hw, T)),
            in_specs=[
                pl.BlockSpec((1, C, T), lambda n, s: (n, 0, s)),
                pl.BlockSpec((1, C, 1), lambda n, s: (0, 0, 0)),
                pl.BlockSpec((1, C, 1), lambda n, s: (0, 0, 0)),
            ],
            out_specs=pl.BlockSpec((1, C, T), lambda n, s: (n, 0, s)),
        ),
        compiler_params=pltpu.CompilerParams(
            dimension_semantics=("parallel", "parallel"),
            vmem_limit_bytes=vmem_limit,
        ),
    )(x3,
      weight.astype(jnp.float32).reshape(1, C, 1),
      bias.astype(jnp.float32).reshape(1, C, 1))
    return out.reshape(x.shape)


def layer_norm(x, weight, bias, eps=1e-6, data_format="channels_last"):
    """Matches konfai ConvNeXt LayerNorm.forward."""
    if data_format not in ("channels_last", "channels_first"):
        raise NotImplementedError
    if x.size == 0:
        return x
    if data_format == "channels_last":
        return _layernorm_channels_last(x, weight, bias, eps)
    return _layernorm_channels_first(x, weight, bias, eps)


# -----------------------------------------------------------------------------
# Reference + test.
# -----------------------------------------------------------------------------
def _reference(x, weight, bias, eps, data_format):
    if data_format == "channels_last":
        w, b = weight, bias
        axis = -1
    else:
        axis = 1
        shape = [1] * x.ndim
        shape[1] = x.shape[1]
        w = weight.reshape(shape)
        b = bias.reshape(shape)
    u = jnp.mean(x, axis=axis, keepdims=True)
    s = jnp.mean((x - u) ** 2, axis=axis, keepdims=True)
    return w * ((x - u) / jnp.sqrt(s + eps)) + b


if __name__ == "__main__":
    key = jax.random.PRNGKey(0)
    k1, k2, k3 = jax.random.split(key, 3)
    eps = 1e-6

    def make_params(c):
        # Module init is weight=ones, bias=zeros; perturb deterministically so
        # the affine part is actually exercised.
        w = jnp.ones((c,), jnp.float32) + 0.1 * jnp.arange(c, dtype=jnp.float32)
        b = jnp.zeros((c,), jnp.float32) + 0.01 * jnp.arange(c, dtype=jnp.float32)
        return w, b

    # channels_first: NCHW conv-style input (downsample-layer LayerNorm).
    C = 4
    w, b = make_params(C)
    x_cf = jax.random.normal(k1, (2, C, 16, 16), dtype=jnp.float32)
    y_cf = jax.block_until_ready(layer_norm(x_cf, w, b, eps, "channels_first"))
    ref_cf = _reference(x_cf, w, b, eps, "channels_first")
    assert jnp.allclose(y_cf, ref_cf, atol=1e-5, rtol=1e-5)

    # channels_last, small power-of-two C -> lane-dense grouped kernel.
    x_cl = jax.random.normal(k2, (2, 16, 16, C), dtype=jnp.float32)
    y_cl = jax.block_until_ready(layer_norm(x_cl, w, b, eps, "channels_last"))
    ref_cl = _reference(x_cl, w, b, eps, "channels_last")
    assert jnp.allclose(y_cl, ref_cl, atol=1e-5, rtol=1e-5)

    # channels_last, ConvNeXt-like C=96 -> general lanes-on-C kernel.
    C2 = 96
    w2, b2 = make_params(C2)
    x_cl2 = jax.random.normal(k3, (2, 4, 4, C2), dtype=jnp.float32)
    y_cl2 = jax.block_until_ready(layer_norm(x_cl2, w2, b2, eps, "channels_last"))
    ref_cl2 = _reference(x_cl2, w2, b2, eps, "channels_last")
    assert jnp.allclose(y_cl2, ref_cl2, atol=1e-5, rtol=1e-5)

    print("KERNEL_OK")
</pallas_src>

<mosaic_0001>
module attributes {stable_mosaic.version = 11 : i64} {
  func.func @_ln_sublane_axis_kernel(%arg0: i32, %arg1: i32, %arg2: memref<1x4x128xf32, #tpu.memory_space<vmem>>, %arg3: memref<1x4x1xf32, #tpu.memory_space<vmem>>, %arg4: memref<1x4x1xf32, #tpu.memory_space<vmem>>, %arg5: memref<1x4x128xf32, #tpu.memory_space<vmem>>) attributes {dimension_semantics = [#tpu.dimension_semantics<parallel>, #tpu.dimension_semantics<parallel>], iteration_bounds = array<i64: 2, 2>, scalar_prefetch = 0 : i64, scratch_operands = 0 : i64, tpu.core_type = #tpu.core_type<tc>, window_params = [{transform_indices = @transform_0, window_bounds = array<i64: 1, 4, 128>}, {pipeline_mode = #tpu.pipeline_mode<synchronous>, transform_indices = @transform_1, window_bounds = array<i64: 1, 4, 1>}, {pipeline_mode = #tpu.pipeline_mode<synchronous>, transform_indices = @transform_2, window_bounds = array<i64: 1, 4, 1>}, {transform_indices = @transform_3, window_bounds = array<i64: 1, 4, 128>}]} {
    %c0 = arith.constant 0 : index
    %c0_0 = arith.constant 0 : index
    %c0_1 = arith.constant 0 : index
    %0 = vector.load %arg2[%c0, %c0_0, %c0_1] : memref<1x4x128xf32, #tpu.memory_space<vmem>>, vector<1x4x128xf32>
    %cst = arith.constant dense<0.000000e+00> : vector<1x128xf32>
    %1 = vector.multi_reduction <add>, %0, %cst [1] : vector<1x4x128xf32> to vector<1x128xf32>
    %2 = vector.shape_cast %1 : vector<1x128xf32> to vector<1x1x128xf32>
    %cst_2 = arith.constant 4.000000e+00 : f32
    %3 = vector.broadcast %cst_2 : f32 to vector<1x1x128xf32>
    %4 = arith.divf %2, %3 : vector<1x1x128xf32>
    %5 = vector.broadcast %4 : vector<1x1x128xf32> to vector<1x4x128xf32>
    %6 = arith.subf %0, %5 : vector<1x4x128xf32>
    %7 = arith.mulf %6, %6 : vector<1x4x128xf32>
    %cst_3 = arith.constant dense<0.000000e+00> : vector<1x128xf32>
    %8 = vector.multi_reduction <add>, %7, %cst_3 [1] : vector<1x4x128xf32> to vector<1x128xf32>
    %9 = vector.shape_cast %8 : vector<1x128xf32> to vector<1x1x128xf32>
    %cst_4 = arith.constant 4.000000e+00 : f32
    %10 = vector.broadcast %cst_4 : f32 to vector<1x1x128xf32>
    %11 = arith.divf %9, %10 : vector<1x1x128xf32>
    %cst_5 = arith.constant 9.99999997E-7 : f32
    %12 = vector.broadcast %cst_5 : f32 to vector<1x1x128xf32>
    %13 = arith.addf %11, %12 : vector<1x1x128xf32>
    %14 = math.rsqrt %13 : vector<1x1x128xf32>
    %c0_6 = arith.constant 0 : index
    %c0_7 = arith.constant 0 : index
    %c0_8 = arith.constant 0 : index
    %15 = vector.load %arg2[%c0_6, %c0_7, %c0_8] : memref<1x4x128xf32, #tpu.memory_space<vmem>>, vector<1x4x128xf32>
    %16 = vector.broadcast %4 : vector<1x1x128xf32> to vector<1x4x128xf32>
    %17 = arith.subf %15, %16 : vector<1x4x128xf32>
    %18 = vector.broadcast %14 : vector<1x1x128xf32> to vector<1x4x128xf32>
    %19 = arith.mulf %17, %18 : vector<1x4x128xf32>
    %c0_9 = arith.constant 0 : index
    %c0_10 = arith.constant 0 : index
    %c0_11 = arith.constant 0 : index
    %20 = vector.load %arg3[%c0_9, %c0_10, %c0_11] : memref<1x4x1xf32, #tpu.memory_space<vmem>>, vector<1x4x1xf32>
    %21 = vector.broadcast %20 : vector<1x4x1xf32> to vector<1x4x128xf32>
    %22 = arith.mulf %19, %21 : vector<1x4x128xf32>
    %c0_12 = arith.constant 0 : index
    %c0_13 = arith.constant 0 : index
    %c0_14 = arith.constant 0 : index
    %23 = vector.load %arg4[%c0_12, %c0_13, %c0_14] : memref<1x4x1xf32, #tpu.memory_space<vmem>>, vector<1x4x1xf32>
    %24 = vector.broadcast %23 : vector<1x4x1xf32> to vector<1x4x128xf32>
    %25 = arith.addf %22, %24 : vector<1x4x128xf32>
    %c0_15 = arith.constant 0 : index
    %c0_16 = arith.constant 0 : index
    %c0_17 = arith.constant 0 : index
    %26 = vector.load %arg5[%c0_15, %c0_16, %c0_17] : memref<1x4x128xf32, #tpu.memory_space<vmem>>, vector<1x4x128xf32>
    tpu.vector_store %arg5[%c0_15, %c0_16, %c0_17], %25 {strides = array<i32>} : memref<1x4x128xf32, #tpu.memory_space<vmem>>, vector<1x4x128xf32>,
    return
  }
  func.func @transform_0(%arg0: i32, %arg1: i32) -> (i32, i32, i32) {
    %c0_i32 = arith.constant 0 : i32
    %c0_i32_0 = arith.constant 0 : i32
    return %arg0, %c0_i32, %arg1 : i32, i32, i32
  }
  func.func @transform_1(%arg0: i32, %arg1: i32) -> (i32, i32, i32) {
    %c0_i32 = arith.constant 0 : i32
    %c0_i32_0 = arith.constant 0 : i32
    %c0_i32_1 = arith.constant 0 : i32
    %c0_i32_2 = arith.constant 0 : i32
    return %c0_i32, %c0_i32_0, %c0_i32_1 : i32, i32, i32
  }
  func.func @transform_2(%arg0: i32, %arg1: i32) -> (i32, i32, i32) {
    %c0_i32 = arith.constant 0 : i32
    %c0_i32_0 = arith.constant 0 : i32
    %c0_i32_1 = arith.constant 0 : i32
    %c0_i32_2 = arith.constant 0 : i32
    return %c0_i32, %c0_i32_0, %c0_i32_1 : i32, i32, i32
  }
  func.func @transform_3(%arg0: i32, %arg1: i32) -> (i32, i32, i32) {
    %c0_i32 = arith.constant 0 : i32
    %c0_i32_0 = arith.constant 0 : i32
    return %arg0, %c0_i32, %arg1 : i32, i32, i32
  }
}

</mosaic_0001>

<llo_original>
// kernel: tpu_custom_call.1
$region0: #{tpu_custom_call.1}
  #allocation0 [shape = 'u32[]', space=smem, size = 0x4, offset = 0x4, fixed_abs, tag = 'smem constant byte address 0x4 - core index']
  #allocation1 [shape = 'u32[144,128]{1,0:T(1,128)}', space=vmem, size = 0x12000, scoped, tag = 'internal scratch']
  %s0 = inlined_call_operand.hbm [shape: f32[2,4,256], index: 0, kind: input, shape index: {}]
  %s1 = inlined_call_operand.vmem [shape: f32[1,4,1], index: 1, kind: input, shape index: {}]
  %s2 = inlined_call_operand.vmem [shape: f32[1,4,1], index: 2, kind: input, shape index: {}]
  %s3 = inlined_call_operand.hbm [shape: f32[2,4,256], index: 3, kind: output, shape index: {}]
  %s4 = sld [smem:[#allocation0]]
  $region49: #{tpu_custom_call.1} parent=0
    _
  %s6 = ssub.s32 1, %s4
  %s7 = scalar_select 0, %s6, %s4
  $region1: #{tpu_custom_call.1} parent=0
    #allocation2 [shape = 'u8[4096]{0}', space=vmem, size = 0x1000, scoped, tag = 'input window, operand 0']
    #allocation3 [shape = 's32[2]{0}', space=sflag, size = 0x8, scoped, tag = 'scoped memory for tpu_custom_call.1']
    #allocation4 [shape = 's32[2]{0}', space=sflag, size = 0x8, scoped, tag = 'scoped memory for tpu_custom_call.1']
    #allocation5 [shape = 'u8[4096]{0}', space=vmem, size = 0x1000, scoped, tag = 'output window, operand 0']
    %8 = vsyncpa [#allocation3], 0
    %s9 = scalar_lea.sflag [#allocation3], 1
    %10 = vsyncpa %s9, 0
    %11 = vsyncpa [#allocation4], 0
    %s12 = scalar_lea.sflag [#allocation4], 1
    %13 = vsyncpa %s12, 0
    loop: start=0, step=1, limit=6
    $region2: #{tpu_custom_call.1} parent=1 // loop_pre_header
      _
    $region3: #{tpu_custom_call.1} parent=1 // loop_header
      %s15 = sphi 0, %s19
      %p16 = scmp.ge.s32.totalorder %s15, 6
      %s22 = sphi 0, %s34
      %s23 = sphi 0, %s30
      %s24 = sphi 0, %s22
      %s25 = sphi 0, %s23
      %s26 = sphi 0, %s24
      %s27 = sphi 0, %s25
      %s39 = sphi 0, %s41
      %s42 = sphi 0, %s39
      %s43 = sphi 0, %s42
      %s59 = sphi 0, %s43
      %s63 = sphi 0, %s63
      %s65 = sphi 0, %s63
      %s66 = sphi 0, %s65
      %s80 = sphi 0, %s66
      %s84 = sphi 0, %s84
      %s86 = sphi 0, %s84
      %s87 = sphi 0, %s86
      %s101 = sphi 0, %s87
      %s109 = sphi 0, %s111
      %s112 = sphi 0, %s109
      %s113 = sphi 0, %s112
      %s129 = sphi 0, %s113
    $region4: #{tpu_custom_call.1} parent=1 // loop_header_branch
      %18 = sbr.rel (%p16) target = $region8
    $region5: #{tpu_custom_call.1} parent=1 // loop_body
      %s20 = ssub.s32 %s15, 1
      %s21 = ssub.s32 %s15, 2
      %s28 = sadd.s32 1, %s23
      %p29 = scmp.ge.s32.totalorder %s28, 2
      %s30 = scalar_select %p29, 0, %s28
      %s31 = sadd.s32 1, %s22
      %s32 = scalar_select %p29, %s31, %s22
      %p33 = scmp.ge.s32.totalorder %s32, 2
      %s34 = scalar_select %p33, 0, %s32
      %s35 = ssub.s32 %s22, %s34
      %s36 = ssub.s32 %s23, %s30
      %s37 = sor.u32 %s35, %s36
      %p38 = scmp.eq.s32.totalorder %s37, 0
      %s40 = sadd.s32 %s39, 1
      %s41 = scalar_select %p38, %s39, %s40
      %p44 = pneg %p38
      %p45 = scmp.eq.s32.totalorder %s15, 3
      %p46 = por %p44, %p45
      %p47 = scmp.ne.s32.totalorder %s39, %s42
      %p48 = scmp.eq.s32.totalorder %s15, 0
      %p49 = por %p47, %p48
      %p50 = scmp.ne.s32.totalorder %s39, %s42
      %p51 = scmp.eq.s32.totalorder %s20, 3
      %p52 = por %p50, %p51
      %p53 = scmp.ne.s32.totalorder %s42, %s43
      %p54 = scmp.eq.s32.totalorder %s20, 0
      %p55 = por %p53, %p54
      %p56 = scmp.ne.s32.totalorder %s42, %s43
      %p57 = scmp.eq.s32.totalorder %s21, 3
      %p58 = por %p56, %p57
      %p60 = scmp.ne.s32.totalorder %s43, %s59
      %p61 = scmp.eq.s32.totalorder %s21, 0
      %p62 = por %p60, %p61
      %s64 = sadd.s32 %s63, 1
      %p67 = scmp.eq.s32.totalorder %s15, 3
      %p68 = scmp.ne.s32.totalorder %s63, %s65
      %p69 = scmp.eq.s32.totalorder %s15, 0
      %p70 = por %p68, %p69
      %p71 = scmp.ne.s32.totalorder %s63, %s65
      %p72 = scmp.eq.s32.totalorder %s20, 3
      %p73 = por %p71, %p72
      %p74 = scmp.ne.s32.totalorder %s65, %s66
      %p75 = scmp.eq.s32.totalorder %s20, 0
      %p76 = por %p74, %p75
      %p77 = scmp.ne.s32.totalorder %s65, %s66
      %p78 = scmp.eq.s32.totalorder %s21, 3
      %p79 = por %p77, %p78
      %p81 = scmp.ne.s32.totalorder %s66, %s80
      %p82 = scmp.eq.s32.totalorder %s21, 0
      %p83 = por %p81, %p82
      %s85 = sadd.s32 %s84, 1
      %p88 = scmp.eq.s32.totalorder %s15, 3
      %p89 = scmp.ne.s32.totalorder %s84, %s86
      %p90 = scmp.eq.s32.totalorder %s15, 0
      %p91 = por %p89, %p90
      %p92 = scmp.ne.s32.totalorder %s84, %s86
      %p93 = scmp.eq.s32.totalorder %s20, 3
      %p94 = por %p92, %p93
      %p95 = scmp.ne.s32.totalorder %s86, %s87
      %p96 = scmp.eq.s32.totalorder %s20, 0
      %p97 = por %p95, %p96
      %p98 = scmp.ne.s32.totalorder %s86, %s87
      %p99 = scmp.eq.s32.totalorder %s21, 3
      %p100 = por %p98, %p99
      %p102 = scmp.ne.s32.totalorder %s87, %s101
      %p103 = scmp.eq.s32.totalorder %s21, 0
      %p104 = por %p102, %p103
      %s105 = ssub.s32 %s22, %s34
      %s106 = ssub.s32 %s23, %s30
      %s107 = sor.u32 %s105, %s106
      %p108 = scmp.eq.s32.totalorder %s107, 0
      %s110 = sadd.s32 %s109, 1
      %s111 = scalar_select %p108, %s109, %s110
      %p114 = pneg %p108
      %p115 = scmp.eq.s32.totalorder %s15, 3
      %p116 = por %p114, %p115
      %p117 = scmp.ne.s32.totalorder %s109, %s112
      %p118 = scmp.eq.s32.totalorder %s15, 0
      %p119 = por %p117, %p118
      %p120 = scmp.ne.s32.totalorder %s109, %s112
      %p121 = scmp.eq.s32.totalorder %s20, 3
      %p122 = por %p120, %p121
      %p123 = scmp.ne.s32.totalorder %s112, %s113
      %p124 = scmp.eq.s32.totalorder %s20, 0
      %p125 = por %p123, %p124
      %p126 = scmp.ne.s32.totalorder %s112, %s113
      %p127 = scmp.eq.s32.totalorder %s21, 3
      %p128 = por %p126, %p127
      %p130 = scmp.ne.s32.totalorder %s113, %s129
      %p131 = scmp.eq.s32.totalorder %s21, 0
      %p132 = por %p130, %p131
      %p133 = scmp.le.s32.totalorder 1, %s15
      %p134 = scmp.lt.s32.totalorder %s15, 5
      %p135 = pnand %p133, %p134
      %p136 = pneg %p135
      // Predicated region
      $region9: #{tpu_custom_call.1} parent=5 // pred_check
        _
      $region10: #{tpu_custom_call.1} parent=5 // pred_check_branch
        %138 = sbr.rel (%p135) target = $region12
      $region11: #{tpu_custom_call.1} parent=5 // pred_region
        %s139 = ssub.s32 %s15, 1
        // Predicated region
        $region13: #{tpu_custom_call.1} parent=11 // pred_check
          %p140 = pneg %p76
        $region14: #{tpu_custom_call.1} parent=11 // pred_check_branch
          %142 = sbr.rel (%p140) target = $region16
        $region15: #{tpu_custom_call.1} parent=11 // pred_region
          _
        $region16: #{tpu_custom_call.1} parent=11 // pred_fallthru
          _
        // Predicated region
        $region17: #{tpu_custom_call.1} parent=11 // pred_check
          %p143 = pneg %p97
        $region18: #{tpu_custom_call.1} parent=11 // pred_check_branch
          %145 = sbr.rel (%p143) target = $region20
        $region19: #{tpu_custom_call.1} parent=11 // pred_region
          _
        $region20: #{tpu_custom_call.1} parent=11 // pred_fallthru
          _
      $region12: #{tpu_custom_call.1} parent=5 // pred_fallthru
        _
      %p146 = scmp.lt.s32.totalorder %s15, 4
      // Predicated region
      $region21: #{tpu_custom_call.1} parent=5 // pred_check
        %p147 = pneg %p146
      $region22: #{tpu_custom_call.1} parent=5 // pred_check_branch
        %149 = sbr.rel (%p147) target = $region24
      $region23: #{tpu_custom_call.1} parent=5 // pred_region
        // Predicated region
        $region25: #{tpu_custom_call.1} parent=23 // pred_check
          %p150 = pneg %p49
        $region26: #{tpu_custom_call.1} parent=23 // pred_check_branch
          %152 = sbr.rel (%p150) target = $region28
        $region27: #{tpu_custom_call.1} parent=23 // pred_region
          %s153 = sand.u32 %s39, 1
          %s154 = scalar_lea.sflag [#allocation3], %s153
          %s155 = sand.u32 %s39, 1
          %s156 = smul.addr %s155, 4
          %s157 = scalar_lea.vmem [#allocation2], %s156
          %s159 = ssub.s32 64, 64
          %160 = vsyncadd %s154, %s159
          %s161 = smul.addr %s22, 2
          %s162 = sadd.s32 %s23, %s161
          %s163 = smul.addr %s162, 64
          %s164 = scalar_lea.hbm %s0, %s163
          %s166 = sshll.u32 %s157, 4
          %s167 = int_to_ptr.vmem [resolvable:$true] %s166
          %169 = dma.hbm_to_vmem [thread:$0]  %s164, 64, %s167, %s154
        $region28: #{tpu_custom_call.1} parent=23 // pred_fallthru
          _
      $region24: #{tpu_custom_call.1} parent=5 // pred_fallthru
        _
      %p170 = scmp.le.s32.totalorder 1, %s15
      %p171 = scmp.lt.s32.totalorder %s15, 5
      %p172 = pnand %p170, %p171
      %p173 = pneg %p172
      // Predicated region
      $region29: #{tpu_custom_call.1} parent=5 // pred_check
        _
      $region30: #{tpu_custom_call.1} parent=5 // pred_check_branch
        %175 = sbr.rel (%p172) target = $region32
      $region31: #{tpu_custom_call.1} parent=5 // pred_region
        %s176 = ssub.s32 %s15, 1
        %s177 = sand.u32 %s42, 1
        %s178 = scalar_lea.sflag [#allocation3], %s177
        %s179 = sand.u32 %s42, 1
        %s180 = smul.addr %s179, 4
        %s181 = scalar_lea.vmem [#allocation2], %s180
        // Predicated region
        $region33: #{tpu_custom_call.1} parent=31 // pred_check
          %p182 = pneg %p55
        $region34: #{tpu_custom_call.1} parent=31 // pred_check_branch
          %184 = sbr.rel (%p182) target = $region36
        $region35: #{tpu_custom_call.1} parent=31 // pred_region
          %185 = dma.done %s178, 64
        $region36: #{tpu_custom_call.1} parent=31 // pred_fallthru
          _
        %s186 = sand.u32 %s42, 1
        %s187 = scalar_lea.sflag [#allocation3], %s186
        %s188 = sand.u32 %s42, 1
        %s189 = smul.addr %s188, 4
        %s190 = scalar_lea.vmem [#allocation2], %s189
        %p191 = pneg %p55
        %p192 = pneg %p52
        %p193 = pneg %p76
        %p194 = pneg %p73
        %p195 = pneg %p97
        %p196 = pneg %p94
        %p197 = pneg %p125
        %p198 = pneg %p122
        %s199 = sand.u32 %s112, 1
        %s200 = scalar_lea.sflag [#allocation4], %s199
        %s201 = sand.u32 %s112, 1
        %s202 = smul.addr %s201, 4
        %s203 = scalar_lea.vmem [#allocation5], %s202
        %v204 = vld [vmem:[%s181] sm:$0xf]
        %vm205 = vcmask 1043456
        %v206 = vsel %vm205, %v204, 0.0
        %v207 = vrot.slane %v206, 4
        %v208 = vadd.f32 %v206, %v207
        %v209 = vrot.slane %v208, 2
        %v210 = vadd.f32 %v208, %v209
        %v211 = vrot.slane %v210, 1
        %v212 = vadd.f32 %v210, %v211
        %v213 = vrcp.pop 4.0
        %v214 = vmul.f32 %v212, %v213
        %v215 = vsub.f32 %v204, %v214
        %v216 = vmul.f32 %v215, %v215
        %v217 = vsel %vm205, %v216, 0.0
        %v218 = vrot.slane %v217, 4
        %v219 = vadd.f32 %v217, %v218
        %v220 = vrot.slane %v219, 2
        %v221 = vadd.f32 %v219, %v220
        %v222 = vrot.slane %v221, 1
        %v223 = vadd.f32 %v221, %v222
        %v224 = vmul.f32 %v223, %v213
        %v225 = vadd.f32 %v224, 1e-06
        %v226 = vrsqrt.pop %v225
        %v227 = vmul.f32 %v215, %v226
        %v228 = vld [vmem:[%s1] sm:$0xf]
        %230 = vset.pattern.permute.xlu0 0
        %231 = vperm.xlu0 %230, %v228
        %v232 = vpop.permute.xlu0 %231
        %v234 = vmul.f32 %v227, %v232
        %v235 = vld [vmem:[%s2] sm:$0xf]
        %237 = vset.pattern.permute.xlu0 0
        %238 = vperm.xlu0 %237, %v235
        %v239 = vpop.permute.xlu0 %238
        %v241 = vadd.f32 %v234, %v239
        %242 = vst [vmem:[%s203] sm:$0xf] %v241
        %s243 = sand.u32 %s112, 1
        %s244 = scalar_lea.sflag [#allocation4], %s243
        %s245 = sand.u32 %s112, 1
        %s246 = smul.addr %s245, 4
        %s247 = scalar_lea.vmem [#allocation5], %s246
        // Predicated region
        $region37: #{tpu_custom_call.1} parent=31 // pred_check
          %p248 = pneg %p122
        $region38: #{tpu_custom_call.1} parent=31 // pred_check_branch
          %250 = sbr.rel (%p248) target = $region40
        $region39: #{tpu_custom_call.1} parent=31 // pred_region
          %s252 = ssub.s32 64, 64
          %253 = vsyncadd %s244, %s252
          %s254 = smul.addr %s24, 2
          %s255 = sadd.s32 %s25, %s254
          %s256 = smul.addr %s255, 64
          %s257 = scalar_lea.hbm %s3, %s256
          %s259 = sshll.u32 %s247, 4
          %s260 = int_to_ptr.vmem [resolvable:$true] %s259
          %262 = dma.vmem_to_hbm [thread:$0]  %s260, 64, %s257, %s244
        $region40: #{tpu_custom_call.1} parent=31 // pred_fallthru
          _
      $region32: #{tpu_custom_call.1} parent=5 // pred_fallthru
        _
      %p263 = scmp.le.s32.totalorder 2, %s15
      // Predicated region
      $region41: #{tpu_custom_call.1} parent=5 // pred_check
        %p264 = pneg %p263
      $region42: #{tpu_custom_call.1} parent=5 // pred_check_branch
        %266 = sbr.rel (%p264) target = $region44
      $region43: #{tpu_custom_call.1} parent=5 // pred_region
        %s267 = ssub.s32 %s15, 2
        // Predicated region
        $region45: #{tpu_custom_call.1} parent=43 // pred_check
          %p268 = pneg %p128
        $region46: #{tpu_custom_call.1} parent=43 // pred_check_branch
          %270 = sbr.rel (%p268) target = $region48
        $region47: #{tpu_custom_call.1} parent=43 // pred_region
          %s271 = sand.u32 %s113, 1
          %s272 = scalar_lea.sflag [#allocation4], %s271
          %s273 = sand.u32 %s113, 1
          %s274 = smul.addr %s273, 4
          %s275 = scalar_lea.vmem [#allocation5], %s274
          %276 = dma.done %s272, 64
        $region48: #{tpu_custom_call.1} parent=43 // pred_fallthru
          _
      $region44: #{tpu_custom_call.1} parent=5 // pred_fallthru
        _
    $region6: #{tpu_custom_call.1} parent=1 // loop_footer
      %s19 = sadd.s32 1, %s15
    $region7: #{tpu_custom_call.1} parent=1 // loop_footer_branch
      %14 = sbr.rel target = $region3
    $region8: #{tpu_custom_call.1} parent=1 // loop_exit
      _
    %277 = vsyncpa [#allocation3], 1
    %s278 = scalar_lea.sflag [#allocation3], 1
    %279 = vsyncpa %s278, 1
    %280 = vsyncpa [#allocation4], 1
    %s281 = scalar_lea.sflag [#allocation4], 1
    %282 = vsyncpa %s281, 1

</llo_original>
